<compile_context>
chip_gen: v6e
topology: v6e:2x2x1
jax: 0.10.0
libtpu: 0.0.40
codegen_flags: <defaults>
</compile_context>

<pallas_src>
import jax
import jax.numpy as jnp
from jax.experimental import pallas as pl
from jax.experimental.pallas import tpu as pltpu


def _round_up(a, m):
    return ((a + m - 1) // m) * m


def _vmem_capacity_bytes():
    """Per-core VMEM capacity; conservative 64 MiB (v7x) fallback."""
    try:
        info = pltpu.get_tpu_info()
        cap = getattr(info, "vmem_capacity_bytes", None)
        if cap:
            return int(cap)
    except Exception:
        pass
    return 64 << 20


def _make_gcn_kernel(n_nodes, tk, ragged, acc_in_out):
    """Build the kernel body (static config baked in via closure)."""

    def kernel(xw_ref, adj_ref, o_ref, *scratch):
        # xw_ref:  (1, tk, out_p)   k-th node slab of XW (compute dtype)
        # adj_ref: (1, N,  tk)      k-th column slab of adjacency
        # o_ref:   (1, N,  out_p)   output tile (resident across the k axis)
        # scratch: optional (1, N, out_p) f32 accumulator (only if out != f32)
        acc_ref = o_ref if acc_in_out else scratch[0]
        k = pl.program_id(1)

        adjk = adj_ref[0]                      # (N, tk)
        xwk = xw_ref[0]                        # (tk, out_p)

        if ragged:
            # Mask the out-of-range tail of the (possibly partial) last tile.
            adt, xdt = adjk.dtype, xwk.dtype
            base = k * tk
            col_ok = (jax.lax.broadcasted_iota(jnp.int32, (1, tk), 1) + base) < n_nodes
            row_ok = (jax.lax.broadcasted_iota(jnp.int32, (tk, 1), 0) + base) < n_nodes
            adjk = jnp.where(col_ok, adjk, 0).astype(adt)
            xwk = jnp.where(row_ok, xwk, 0).astype(xdt)

        # Dominant matmul: bf16 (or f32) inputs, f32 accumulation on the MXU.
        contrib = jnp.dot(adjk, xwk, preferred_element_type=jnp.float32)  # (N, out_p)

        @pl.when(k == 0)
        def _first():                          # assign: no zero-init RMW pass
            acc_ref[0] = contrib.astype(acc_ref.dtype)

        @pl.when(k > 0)
        def _accumulate():
            acc_ref[0] += contrib.astype(acc_ref.dtype)

        @pl.when(k == pl.num_programs(1) - 1)
        def _epilogue():
            axw = acc_ref[0].astype(jnp.float32)                 # (N, out_p)
            y_relu = jnp.maximum(axw, 0.0)
            col_mean = jnp.mean(y_relu, axis=0, keepdims=True) + 1e-6  # (1, out_p)
            y_norm = y_relu / col_mean                           # exact; runs once
            # softplus(x) = log(1 + exp(x)) == logaddexp(x, 0)
            o_ref[0] = jnp.logaddexp(y_norm, 0.0).astype(o_ref.dtype)

    return kernel


def gcn_forward(x, adj, kernel, *, compute_dtype=jnp.bfloat16, interpret=False,
                _force_tk=None):
    """x: (B, N, in_dim), adj: (B, N, N), kernel: (in_dim, out_dim).

    compute_dtype: dtype of the dominant adj @ XW matmul inputs (accumulation
    stays f32).  bf16 default -- halves adj HBM traffic and runs the MXU at
    full bf16 rate.  Pass compute_dtype=jnp.float32 for exact f32 numerics,
    or store adj in bf16 upstream so no per-call cast is needed.
    """
    B, N, in_dim = x.shape
    assert adj.shape == (B, N, N)
    assert kernel.shape[0] == in_dim
    out_dim = kernel.shape[1]
    out_dtype = x.dtype

    cd = jnp.dtype(compute_dtype) if compute_dtype is not None else jnp.dtype(adj.dtype)
    if adj.dtype != cd:
        # NOTE: store adj in `compute_dtype` upstream to avoid this cast -- it
        # is an extra full HBM read+write of the dominant (B, N, N) array.
        adj = adj.astype(cd)

    # ---- lane-dense output: pad out_dim up to a multiple of 128 -------------
    out_p = _round_up(out_dim, 128)
    w = kernel if out_p == out_dim else jnp.pad(kernel, ((0, 0), (0, out_p - out_dim)))

    # ---- hoist XW = x @ W (tiny vs. adj HBM traffic) -------------------------
    xw = jnp.einsum(
        "bni,io->bno", x.astype(jnp.float32), w.astype(jnp.float32),
        precision=jax.lax.Precision.HIGHEST,
    ).astype(cd)                                              # (B, N, out_p)

    acc_in_out = jnp.dtype(out_dtype) == jnp.float32
    cd_size = cd.itemsize
    out_size = jnp.dtype(out_dtype).itemsize

    # ---- generation-aware, closed-loop tile / VMEM sizing --------------------
    budget = int(_vmem_capacity_bytes() * 0.85)   # headroom for compiler scratch

    def vmem_need(tk_):
        return (2 * N * tk_ * cd_size             # adj slab (double-buffered)
                + 2 * tk_ * out_p * cd_size       # XW slab (double-buffered)
                + 2 * N * out_p * out_size        # resident output block buffers
                + (0 if acc_in_out else N * out_p * 4))   # f32 accumulator

    if _force_tk is not None:
        tk = int(_force_tk)                       # testing hook
    elif vmem_need(N) <= budget:
        tk = N                                    # single k step, no masking
    else:
        tk = 128
        for cand in (4096, 2048, 1024, 512, 256):  # largest slab that fits wins
            if cand < N and vmem_need(cand) <= budget:
                tk = cand
                break
    num_k = pl.cdiv(N, tk)
    ragged = (N % tk) != 0

    vmem_limit = int(max(16 << 20,
                         min(budget, int(vmem_need(tk) * 1.25) + (2 << 20))))

    scratch_shapes = [] if acc_in_out else [pltpu.VMEM((1, N, out_p), jnp.float32)]

    out_padded = pl.pallas_call(
        _make_gcn_kernel(N, tk, ragged, acc_in_out),
        out_shape=jax.ShapeDtypeStruct((B, N, out_p), out_dtype),
        grid_spec=pltpu.PrefetchScalarGridSpec(
            num_scalar_prefetch=0,
            grid=(B, num_k),
            in_specs=[
                pl.BlockSpec((1, tk, out_p), lambda b, k: (b, k, 0)),   # XW slab
                pl.BlockSpec((1, N, tk), lambda b, k: (b, 0, k)),       # adj slab
            ],
            out_specs=pl.BlockSpec((1, N, out_p), lambda b, k: (b, 0, 0)),
            scratch_shapes=scratch_shapes,
        ),
        compiler_params=pltpu.CompilerParams(
            # batch axis parallel (feeds both v7x TCs when B >= 2);
            # contraction axis is a reduction -> arbitrary.
            dimension_semantics=("parallel", "arbitrary"),
            vmem_limit_bytes=vmem_limit,
        ),
        interpret=interpret,
    )(xw, adj)

    # Drop the zero-padded output columns (they only hold softplus(0) = ln 2).
    return out_padded[..., :out_dim]


def gcn_reference(x, adj, kernel, compute_dtype=None):
    """Pure-JAX reference.  If compute_dtype is given, mimic the kernel's
    rounding of adj and XW to that dtype ahead of the dominant matmul."""
    f32 = jnp.float32
    hi = jax.lax.Precision.HIGHEST
    xw = jnp.einsum("bni,io->bno", x.astype(f32), kernel.astype(f32), precision=hi)
    if compute_dtype is not None:
        xw = xw.astype(compute_dtype)
        adj = adj.astype(compute_dtype)
    axw = jnp.einsum("bnm,bmo->bno", adj.astype(f32), xw.astype(f32), precision=hi)
    y_relu = jnp.maximum(axw, 0.0)
    col_mean = jnp.mean(y_relu, axis=-2, keepdims=True) + 1e-6
    return jnp.logaddexp(y_relu / col_mean, 0.0)


if __name__ == "__main__":
    # Small shapes consistent with the module's forward.
    B, N, in_dim, out_dim = 2, 16, 32, 32

    key = jax.random.PRNGKey(0)
    kx, ka, kw = jax.random.split(key, 3)

    x = jax.random.normal(kx, (B, N, in_dim), dtype=jnp.float32)

    # symmetric-ish adjacency in [0, 1)
    a = jax.random.uniform(ka, (B, N, N), dtype=jnp.float32)
    adj = 0.5 * (a + jnp.swapaxes(a, -1, -2))

    # Xavier-normal-style init for the GCN kernel (deterministic)
    std = (2.0 / (in_dim + out_dim)) ** 0.5
    kernel = std * jax.random.normal(kw, (in_dim, out_dim), dtype=jnp.float32)

    # 1) exact f32 compute path
    out_f32 = jax.block_until_ready(
        gcn_forward(x, adj, kernel, compute_dtype=jnp.float32))
    ref_f32 = gcn_reference(x, adj, kernel)
    assert out_f32.shape == (B, N, out_dim)
    assert jnp.allclose(out_f32, ref_f32, atol=2e-3, rtol=2e-3), "f32 mismatch"

    # 2) default bf16 compute path, with adj stored in bf16 "upstream"
    #    (no per-call cast of the dominant array inside gcn_forward).
    adj_bf16 = adj.astype(jnp.bfloat16)
    out_bf16 = jax.block_until_ready(gcn_forward(x, adj_bf16, kernel))
    ref_bf16 = gcn_reference(x, adj, kernel, compute_dtype=jnp.bfloat16)
    assert out_bf16.shape == (B, N, out_dim)
    assert jnp.allclose(out_bf16, ref_bf16, atol=1e-2, rtol=1e-2), "bf16 mismatch"

    # 3) k-tiled path with a ragged last tile (forced small tile so the
    #    masking branch is exercised at small shapes; no jnp.pad of adj).
    N2 = 144
    x2 = jax.random.normal(kx, (B, N2, in_dim), dtype=jnp.float32)
    a2 = jax.random.uniform(ka, (B, N2, N2), dtype=jnp.float32)
    adj2 = 0.5 * (a2 + jnp.swapaxes(a2, -1, -2))
    out2 = jax.block_until_ready(
        gcn_forward(x2, adj2, kernel, compute_dtype=jnp.float32, _force_tk=128))
    ref2 = gcn_reference(x2, adj2, kernel)
    assert out2.shape == (B, N2, out_dim)
    assert jnp.allclose(out2, ref2, atol=2e-3, rtol=2e-3), "tiled/ragged mismatch"

    print("KERNEL_OK")
</pallas_src>

<mosaic_0001>
module attributes {stable_mosaic.version = 11 : i64} {
  func.func @kernel(%arg0: i32, %arg1: i32, %arg2: memref<1x16x128xf32, #tpu.memory_space<vmem>>, %arg3: memref<1x16x16xf32, #tpu.memory_space<vmem>>, %arg4: memref<1x16x128xf32, #tpu.memory_space<vmem>>) attributes {dimension_semantics = [#tpu.dimension_semantics<parallel>, #tpu.dimension_semantics<arbitrary>], iteration_bounds = array<i64: 2, 1>, scalar_prefetch = 0 : i64, scratch_operands = 0 : i64, tpu.core_type = #tpu.core_type<tc>, window_params = [{transform_indices = @transform_0, window_bounds = array<i64: 1, 16, 128>}, {transform_indices = @transform_1, window_bounds = array<i64: 1, 16, 16>}, {transform_indices = @transform_2, window_bounds = array<i64: 1, 16, 128>}]} {
    %c0 = arith.constant 0 : index
    %c0_0 = arith.constant 0 : index
    %c0_1 = arith.constant 0 : index
    %0 = vector.load %arg3[%c0, %c0_0, %c0_1] : memref<1x16x16xf32, #tpu.memory_space<vmem>>, vector<1x16x16xf32>
    %1 = vector.shape_cast %0 : vector<1x16x16xf32> to vector<16x16xf32>
    %c0_2 = arith.constant 0 : index
    %c0_3 = arith.constant 0 : index
    %c0_4 = arith.constant 0 : index
    %2 = vector.load %arg2[%c0_2, %c0_3, %c0_4] : memref<1x16x128xf32, #tpu.memory_space<vmem>>, vector<1x16x128xf32>
    %3 = vector.shape_cast %2 : vector<1x16x128xf32> to vector<16x128xf32>
    %cst = arith.constant dense<0.000000e+00> : vector<16x128xf32>
    %4 = tpu.matmul %1, %3, %cst {dimension_numbers = #tpu.dot_dimension_numbers<[1], [0], [0], [1], [0, 0, 1, 1], [], []>} : vector<16x16xf32>, vector<16x128xf32>, vector<16x128xf32> -> vector<16x128xf32>
    %c0_i32 = arith.constant 0 : i32
    %5 = arith.cmpi eq, %arg1, %c0_i32 : i32
    %6 = arith.extui %5 : i1 to i32
    %c0_i32_5 = arith.constant 0 : i32
    %7 = arith.cmpi ne, %6, %c0_i32_5 : i32
    scf.if %7 {
      %c0_10 = arith.constant 0 : index
      %c0_11 = arith.constant 0 : index
      %c0_12 = arith.constant 0 : index
      %14 = vector.load %arg4[%c0_10, %c0_11, %c0_12] : memref<1x16x128xf32, #tpu.memory_space<vmem>>, vector<1x16x128xf32>
      %15 = vector.shape_cast %14 : vector<1x16x128xf32> to vector<16x128xf32>
      %16 = vector.shape_cast %4 : vector<16x128xf32> to vector<1x16x128xf32>
      tpu.vector_store %arg4[%c0_10, %c0_11, %c0_12], %16 {strides = array<i32>} : memref<1x16x128xf32, #tpu.memory_space<vmem>>, vector<1x16x128xf32>,
    } else {
    }
    %c0_i32_6 = arith.constant 0 : i32
    %8 = arith.cmpi sgt, %arg1, %c0_i32_6 : i32
    %9 = arith.extui %8 : i1 to i32
    %c0_i32_7 = arith.constant 0 : i32
    %10 = arith.cmpi ne, %9, %c0_i32_7 : i32
    scf.if %10 {
      %c0_10 = arith.constant 0 : index
      %c0_11 = arith.constant 0 : index
      %c0_12 = arith.constant 0 : index
      %14 = vector.load %arg4[%c0_10, %c0_11, %c0_12] : memref<1x16x128xf32, #tpu.memory_space<vmem>>, vector<1x16x128xf32>
      %15 = vector.shape_cast %14 : vector<1x16x128xf32> to vector<16x128xf32>
      %16 = arith.addf %15, %4 : vector<16x128xf32>
      %c0_13 = arith.constant 0 : index
      %c0_14 = arith.constant 0 : index
      %c0_15 = arith.constant 0 : index
      %17 = vector.load %arg4[%c0_13, %c0_14, %c0_15] : memref<1x16x128xf32, #tpu.memory_space<vmem>>, vector<1x16x128xf32>
      %18 = vector.shape_cast %17 : vector<1x16x128xf32> to vector<16x128xf32>
      %19 = vector.shape_cast %16 : vector<16x128xf32> to vector<1x16x128xf32>
      tpu.vector_store %arg4[%c0_13, %c0_14, %c0_15], %19 {strides = array<i32>} : memref<1x16x128xf32, #tpu.memory_space<vmem>>, vector<1x16x128xf32>,
    } else {
    }
    %c0_i32_8 = arith.constant 0 : i32
    %11 = arith.cmpi eq, %arg1, %c0_i32_8 : i32
    %12 = arith.extui %11 : i1 to i32
    %c0_i32_9 = arith.constant 0 : i32
    %13 = arith.cmpi ne, %12, %c0_i32_9 : i32
    scf.if %13 {
      %c0_10 = arith.constant 0 : index
      %c0_11 = arith.constant 0 : index
      %c0_12 = arith.constant 0 : index
      %14 = vector.load %arg4[%c0_10, %c0_11, %c0_12] : memref<1x16x128xf32, #tpu.memory_space<vmem>>, vector<1x16x128xf32>
      %15 = vector.shape_cast %14 : vector<1x16x128xf32> to vector<16x128xf32>
      %cst_13 = arith.constant 0.000000e+00 : f32
      %16 = vector.broadcast %cst_13 : f32 to vector<16x128xf32>
      %17 = arith.maximumf %15, %16 : vector<16x128xf32>
      %cst_14 = arith.constant dense<0.000000e+00> : vector<128xf32>
      %18 = vector.multi_reduction <add>, %17, %cst_14 [0] : vector<16x128xf32> to vector<128xf32>
      %19 = vector.shape_cast %18 : vector<128xf32> to vector<1x128xf32>
      %cst_15 = arith.constant 1.600000e+01 : f32
      %20 = vector.broadcast %cst_15 : f32 to vector<1x128xf32>
      %21 = arith.divf %19, %20 : vector<1x128xf32>
      %cst_16 = arith.constant 9.99999997E-7 : f32
      %22 = vector.broadcast %cst_16 : f32 to vector<1x128xf32>
      %23 = arith.addf %21, %22 : vector<1x128xf32>
      %24 = vector.broadcast %23 : vector<1x128xf32> to vector<16x128xf32>
      %25 = arith.divf %17, %24 : vector<16x128xf32>
      %cst_17 = arith.constant 0.000000e+00 : f32
      %26 = vector.broadcast %cst_17 : f32 to vector<16x128xf32>
      %27 = arith.maximumf %25, %26 : vector<16x128xf32>
      %28 = vector.broadcast %cst_17 : f32 to vector<16x128xf32>
      %29 = arith.subf %25, %28 : vector<16x128xf32>
      %30 = arith.cmpf one, %29, %29 : vector<16x128xf32>
      %31 = vector.broadcast %cst_17 : f32 to vector<16x128xf32>
      %32 = arith.addf %25, %31 : vector<16x128xf32>
      %33 = math.absf %29 : vector<16x128xf32>
      %cst_18 = arith.constant 0.000000e+00 : f32
      %34 = vector.broadcast %cst_18 : f32 to vector<16x128xf32>
      %35 = arith.subf %34, %33 : vector<16x128xf32>
      %36 = math.exp %35 : vector<16x128xf32>
      %37 = math.log1p %36 : vector<16x128xf32>
      %38 = arith.addf %27, %37 : vector<16x128xf32>
      %39 = arith.select %30, %32, %38 : vector<16x128xi1>, vector<16x128xf32>
      %c0_19 = arith.constant 0 : index
      %c0_20 = arith.constant 0 : index
      %c0_21 = arith.constant 0 : index
      %40 = vector.load %arg4[%c0_19, %c0_20, %c0_21] : memref<1x16x128xf32, #tpu.memory_space<vmem>>, vector<1x16x128xf32>
      %41 = vector.shape_cast %40 : vector<1x16x128xf32> to vector<16x128xf32>
      %42 = vector.shape_cast %39 : vector<16x128xf32> to vector<1x16x128xf32>
      tpu.vector_store %arg4[%c0_19, %c0_20, %c0_21], %42 {strides = array<i32>} : memref<1x16x128xf32, #tpu.memory_space<vmem>>, vector<1x16x128xf32>,
    } else {
    }
    return
  }
  func.func @transform_0(%arg0: i32, %arg1: i32) -> (i32, i32, i32) {
    %c0_i32 = arith.constant 0 : i32
    %c0_i32_0 = arith.constant 0 : i32
    return %arg0, %arg1, %c0_i32 : i32, i32, i32
  }
  func.func @transform_1(%arg0: i32, %arg1: i32) -> (i32, i32, i32) {
    %c0_i32 = arith.constant 0 : i32
    %c0_i32_0 = arith.constant 0 : i32
    return %arg0, %c0_i32, %arg1 : i32, i32, i32
  }
  func.func @transform_2(%arg0: i32, %arg1: i32) -> (i32, i32, i32) {
    %c0_i32 = arith.constant 0 : i32
    %c0_i32_0 = arith.constant 0 : i32
    %c0_i32_1 = arith.constant 0 : i32
    return %arg0, %c0_i32, %c0_i32_0 : i32, i32, i32
  }
}

</mosaic_0001>

<llo_original>
// kernel: tpu_custom_call.1
$region0: #{tpu_custom_call.1}
  #allocation0 [shape = 'u32[]', space=smem, size = 0x4, offset = 0x4, fixed_abs, tag = 'smem constant byte address 0x4 - core index']
  #allocation1 [shape = 'u32[144,128]{1,0:T(1,128)}', space=vmem, size = 0x12000, scoped, tag = 'internal scratch']
  %s0 = inlined_call_operand.hbm [shape: f32[2,16,128], index: 0, kind: input, shape index: {}]
  %s1 = inlined_call_operand.hbm [shape: f32[2,16,16], index: 1, kind: input, shape index: {}]
  %s2 = inlined_call_operand.hbm [shape: f32[2,16,128], index: 2, kind: output, shape index: {}]
  %s3 = sld [smem:[#allocation0]]
  $region61: #{tpu_custom_call.1} parent=0
    _
  %s5 = ssub.s32 1, %s3
  %s6 = scalar_select 0, %s5, %s3
  $region1: #{tpu_custom_call.1} parent=0
    #allocation2 [shape = 'u8[16384]{0}', space=vmem, size = 0x4000, scoped, tag = 'input window, operand 0']
    #allocation3 [shape = 's32[2]{0}', space=sflag, size = 0x8, scoped, tag = 'scoped memory for tpu_custom_call.1']
    #allocation4 [shape = 's32[2]{0}', space=sflag, size = 0x8, scoped, tag = 'scoped memory for tpu_custom_call.1']
    #allocation5 [shape = 'u8[16384]{0}', space=vmem, size = 0x4000, scoped, tag = 'input window, operand 1']
    #allocation6 [shape = 's32[2]{0}', space=sflag, size = 0x8, scoped, tag = 'scoped memory for tpu_custom_call.1']
    #allocation7 [shape = 'u8[16384]{0}', space=vmem, size = 0x4000, scoped, tag = 'output window, operand 0']
    %7 = vsyncpa [#allocation3], 0
    %s8 = scalar_lea.sflag [#allocation3], 1
    %9 = vsyncpa %s8, 0
    %10 = vsyncpa [#allocation6], 0
    %s11 = scalar_lea.sflag [#allocation6], 1
    %12 = vsyncpa %s11, 0
    %13 = vsyncpa [#allocation4], 0
    %s14 = scalar_lea.sflag [#allocation4], 1
    %15 = vsyncpa %s14, 0
    loop: start=0, step=1, limit=4
    $region2: #{tpu_custom_call.1} parent=1 // loop_pre_header
      _
    $region3: #{tpu_custom_call.1} parent=1 // loop_header
      %s17 = sphi 0, %s21
      %p18 = scmp.ge.s32.totalorder %s17, 4
      %s24 = sphi 0, %s36
      %s25 = sphi 0, %s32
      %s26 = sphi 0, %s24
      %s27 = sphi 0, %s25
      %s28 = sphi 0, %s26
      %s29 = sphi 0, %s27
      %s41 = sphi 0, %s43
      %s44 = sphi 0, %s41
      %s45 = sphi 0, %s44
      %s61 = sphi 0, %s45
      %s69 = sphi 0, %s71
      %s72 = sphi 0, %s69
      %s73 = sphi 0, %s72
      %s89 = sphi 0, %s73
      %s95 = sphi 0, %s97
      %s98 = sphi 0, %s95
      %s99 = sphi 0, %s98
      %s115 = sphi 0, %s99
    $region4: #{tpu_custom_call.1} parent=1 // loop_header_branch
      %20 = sbr.rel (%p18) target = $region8
    $region5: #{tpu_custom_call.1} parent=1 // loop_body
      %s22 = ssub.s32 %s17, 1
      %s23 = ssub.s32 %s17, 2
      %s30 = sadd.s32 1, %s25
      %p31 = scmp.ge.s32.totalorder %s30, 1
      %s32 = scalar_select %p31, 0, %s30
      %s33 = sadd.s32 1, %s24
      %s34 = scalar_select %p31, %s33, %s24
      %p35 = scmp.ge.s32.totalorder %s34, 2
      %s36 = scalar_select %p35, 0, %s34
      %s37 = ssub.s32 %s24, %s36
      %s38 = ssub.s32 %s25, %s32
      %s39 = sor.u32 %s37, %s38
      %p40 = scmp.eq.s32.totalorder %s39, 0
      %s42 = sadd.s32 %s41, 1
      %s43 = scalar_select %p40, %s41, %s42
      %p46 = pneg %p40
      %p47 = scmp.eq.s32.totalorder %s17, 1
      %p48 = por %p46, %p47
      %p49 = scmp.ne.s32.totalorder %s41, %s44
      %p50 = scmp.eq.s32.totalorder %s17, 0
      %p51 = por %p49, %p50
      %p52 = scmp.ne.s32.totalorder %s41, %s44
      %p53 = scmp.eq.s32.totalorder %s22, 1
      %p54 = por %p52, %p53
      %p55 = scmp.ne.s32.totalorder %s44, %s45
      %p56 = scmp.eq.s32.totalorder %s22, 0
      %p57 = por %p55, %p56
      %p58 = scmp.ne.s32.totalorder %s44, %s45
      %p59 = scmp.eq.s32.totalorder %s23, 1
      %p60 = por %p58, %p59
      %p62 = scmp.ne.s32.totalorder %s45, %s61
      %p63 = scmp.eq.s32.totalorder %s23, 0
      %p64 = por %p62, %p63
      %s65 = ssub.s32 %s24, %s36
      %s66 = ssub.s32 %s25, %s32
      %s67 = sor.u32 %s65, %s66
      %p68 = scmp.eq.s32.totalorder %s67, 0
      %s70 = sadd.s32 %s69, 1
      %s71 = scalar_select %p68, %s69, %s70
      %p74 = pneg %p68
      %p75 = scmp.eq.s32.totalorder %s17, 1
      %p76 = por %p74, %p75
      %p77 = scmp.ne.s32.totalorder %s69, %s72
      %p78 = scmp.eq.s32.totalorder %s17, 0
      %p79 = por %p77, %p78
      %p80 = scmp.ne.s32.totalorder %s69, %s72
      %p81 = scmp.eq.s32.totalorder %s22, 1
      %p82 = por %p80, %p81
      %p83 = scmp.ne.s32.totalorder %s72, %s73
      %p84 = scmp.eq.s32.totalorder %s22, 0
      %p85 = por %p83, %p84
      %p86 = scmp.ne.s32.totalorder %s72, %s73
      %p87 = scmp.eq.s32.totalorder %s23, 1
      %p88 = por %p86, %p87
      %p90 = scmp.ne.s32.totalorder %s73, %s89
      %p91 = scmp.eq.s32.totalorder %s23, 0
      %p92 = por %p90, %p91
      %s93 = ssub.s32 %s24, %s36
      %p94 = scmp.eq.s32.totalorder %s93, 0
      %s96 = sadd.s32 %s95, 1
      %s97 = scalar_select %p94, %s95, %s96
      %p100 = pneg %p94
      %p101 = scmp.eq.s32.totalorder %s17, 1
      %p102 = por %p100, %p101
      %p103 = scmp.ne.s32.totalorder %s95, %s98
      %p104 = scmp.eq.s32.totalorder %s17, 0
      %p105 = por %p103, %p104
      %p106 = scmp.ne.s32.totalorder %s95, %s98
      %p107 = scmp.eq.s32.totalorder %s22, 1
      %p108 = por %p106, %p107
      %p109 = scmp.ne.s32.totalorder %s98, %s99
      %p110 = scmp.eq.s32.totalorder %s22, 0
      %p111 = por %p109, %p110
      %p112 = scmp.ne.s32.totalorder %s98, %s99
      %p113 = scmp.eq.s32.totalorder %s23, 1
      %p114 = por %p112, %p113
      %p116 = scmp.ne.s32.totalorder %s99, %s115
      %p117 = scmp.eq.s32.totalorder %s23, 0
      %p118 = por %p116, %p117
      %p119 = scmp.le.s32.totalorder 1, %s17
      %p120 = scmp.lt.s32.totalorder %s17, 3
      %p121 = pnand %p119, %p120
      %p122 = pneg %p121
      // Predicated region
      $region9: #{tpu_custom_call.1} parent=5 // pred_check
        _
      $region10: #{tpu_custom_call.1} parent=5 // pred_check_branch
        %124 = sbr.rel (%p121) target = $region12
      $region11: #{tpu_custom_call.1} parent=5 // pred_region
        %s125 = ssub.s32 %s17, 1
      $region12: #{tpu_custom_call.1} parent=5 // pred_fallthru
        _
      %p126 = scmp.lt.s32.totalorder %s17, 2
      // Predicated region
      $region13: #{tpu_custom_call.1} parent=5 // pred_check
        %p127 = pneg %p126
      $region14: #{tpu_custom_call.1} parent=5 // pred_check_branch
        %129 = sbr.rel (%p127) target = $region16
      $region15: #{tpu_custom_call.1} parent=5 // pred_region
        // Predicated region
        $region17: #{tpu_custom_call.1} parent=15 // pred_check
          %p130 = pneg %p51
        $region18: #{tpu_custom_call.1} parent=15 // pred_check_branch
          %132 = sbr.rel (%p130) target = $region20
        $region19: #{tpu_custom_call.1} parent=15 // pred_region
          %s133 = sand.u32 %s41, 1
          %s134 = scalar_lea.sflag [#allocation3], %s133
          %s135 = sand.u32 %s41, 1
          %s136 = smul.addr %s135, 16
          %s137 = scalar_lea.vmem [#allocation2], %s136
          %s138 = smul.u32 2, %s25
          %s140 = ssub.s32 256, 256
          %141 = vsyncadd %s134, %s140
          %s142 = smul.addr %s24, 2
          %s143 = sadd.s32 %s138, %s142
          %s144 = smul.addr %s143, 128
          %s145 = scalar_lea.hbm %s0, %s144
          %s146 = sshll.u32 %s137, 4
          %s147 = int_to_ptr.vmem [resolvable:$true] %s146
          %152 = dma.hbm_to_vmem [thread:$0]  %s145, 256, %s147, %s134, 128, 128, 8
        $region20: #{tpu_custom_call.1} parent=15 // pred_fallthru
          _
        // Predicated region
        $region21: #{tpu_custom_call.1} parent=15 // pred_check
          %p153 = pneg %p79
        $region22: #{tpu_custom_call.1} parent=15 // pred_check_branch
          %155 = sbr.rel (%p153) target = $region24
        $region23: #{tpu_custom_call.1} parent=15 // pred_region
          %s156 = sand.u32 %s69, 1
          %s157 = scalar_lea.sflag [#allocation6], %s156
          %s158 = sand.u32 %s69, 1
          %s159 = smul.addr %s158, 16
          %s160 = scalar_lea.vmem [#allocation5], %s159
          %s162 = ssub.s32 256, 256
          %163 = vsyncadd %s157, %s162
          %s164 = smul.addr %s24, 2
          %s165 = sadd.s32 %s25, %s164
          %s166 = smul.addr %s165, 128
          %s167 = scalar_lea.hbm %s1, %s166
          %s168 = sshll.u32 %s160, 4
          %s169 = int_to_ptr.vmem [resolvable:$true] %s168
          %174 = dma.hbm_to_vmem [thread:$0]  %s167, 256, %s169, %s157, 128, 128, 8
        $region24: #{tpu_custom_call.1} parent=15 // pred_fallthru
          _
      $region16: #{tpu_custom_call.1} parent=5 // pred_fallthru
        _
      %p175 = scmp.le.s32.totalorder 1, %s17
      %p176 = scmp.lt.s32.totalorder %s17, 3
      %p177 = pnand %p175, %p176
      %p178 = pneg %p177
      // Predicated region
      $region25: #{tpu_custom_call.1} parent=5 // pred_check
        _
      $region26: #{tpu_custom_call.1} parent=5 // pred_check_branch
        %180 = sbr.rel (%p177) target = $region28
      $region27: #{tpu_custom_call.1} parent=5 // pred_region
        %s181 = ssub.s32 %s17, 1
        %s182 = sand.u32 %s44, 1
        %s183 = scalar_lea.sflag [#allocation3], %s182
        %s184 = sand.u32 %s44, 1
        %s185 = smul.addr %s184, 16
        %s186 = scalar_lea.vmem [#allocation2], %s185
        // Predicated region
        $region29: #{tpu_custom_call.1} parent=27 // pred_check
          %p187 = pneg %p57
        $region30: #{tpu_custom_call.1} parent=27 // pred_check_branch
          %189 = sbr.rel (%p187) target = $region32
        $region31: #{tpu_custom_call.1} parent=27 // pred_region
          %190 = dma.done %s183, 256
        $region32: #{tpu_custom_call.1} parent=27 // pred_fallthru
          _
        %s191 = sand.u32 %s72, 1
        %s192 = scalar_lea.sflag [#allocation6], %s191
        %s193 = sand.u32 %s72, 1
        %s194 = smul.addr %s193, 16
        %s195 = scalar_lea.vmem [#allocation5], %s194
        // Predicated region
        $region33: #{tpu_custom_call.1} parent=27 // pred_check
          %p196 = pneg %p85
        $region34: #{tpu_custom_call.1} parent=27 // pred_check_branch
          %198 = sbr.rel (%p196) target = $region36
        $region35: #{tpu_custom_call.1} parent=27 // pred_region
          %199 = dma.done %s192, 256
        $region36: #{tpu_custom_call.1} parent=27 // pred_fallthru
          _
        %s200 = sand.u32 %s44, 1
        %s201 = scalar_lea.sflag [#allocation3], %s200
        %s202 = sand.u32 %s44, 1
        %s203 = smul.addr %s202, 16
        %s204 = scalar_lea.vmem [#allocation2], %s203
        %p205 = pneg %p57
        %p206 = pneg %p54
        %s207 = sand.u32 %s72, 1
        %s208 = scalar_lea.sflag [#allocation6], %s207
        %s209 = sand.u32 %s72, 1
        %s210 = smul.addr %s209, 16
        %s211 = scalar_lea.vmem [#allocation5], %s210
        %p212 = pneg %p85
        %p213 = pneg %p82
        %p214 = pneg %p111
        %p215 = pneg %p108
        %s216 = sand.u32 %s98, 1
        %s217 = scalar_lea.sflag [#allocation4], %s216
        %s218 = sand.u32 %s98, 1
        %s219 = smul.addr %s218, 16
        %s220 = scalar_lea.vmem [#allocation7], %s219
        %s221 = smul.u32 2, %s27
        %v222 = vld [vmem:[%s195] sm:$0xff]
        %v223 = vld [vmem:[%s195 + $0x8] sm:$0xff]
        %v224 = vld [vmem:[%s186] sm:$0xff]
        %v225 = vld [vmem:[%s186 + $0x8] sm:$0xff]
        %vm226 = vcmask 130048
        %v228 = vsel %vm226, %v222, 0
        %v231 = vsel %vm226, %v223, 0
        %233 = vmatprep.subr.mxu0 0.0
        %234 = vmatpush1.msra.mxu0 0.0
        %235 = vmatprep.subr.mxu0 0.0
        %236 = vmatpush1.msra.mxu0 0.0
        %237 = vmatprep.subr.mxu0 0.0
        %238 = vmatpush1.msra.mxu0 0.0
        %239 = vmatprep.subr.mxu0 0.0
        %240 = vmatpush1.msra.mxu0 0.0
        %241 = vmatprep.subr.mxu0 0.0
        %242 = vmatpush1.msra.mxu0 0.0
        %243 = vmatprep.subr.mxu0 0.0
        %244 = vmatpush1.msra.mxu0 0.0
        %245 = vmatprep.subr.mxu0 0.0
        %246 = vmatpush1.msra.mxu0 0.0
        %247 = vmatprep.subr.mxu0 0.0
        %248 = vmatpush1.msra.mxu0 0.0
        %249 = vmatprep.subr.mxu0 0.0
        %250 = vmatpush1.msra.mxu0 0.0
        %251 = vmatprep.subr.mxu0 0.0
        %252 = vmatpush1.msra.mxu0 0.0
        %253 = vmatprep.subr.mxu0 0.0
        %254 = vmatpush1.msra.mxu0 0.0
        %255 = vmatprep.subr.mxu0 0.0
        %256 = vmatpush1.msra.mxu0 0.0
        %257 = vmatprep.subr.mxu0 0.0
        %258 = vmatpush1.msra.mxu0 0.0
        %259 = vmatprep.subr.mxu0 0.0
        %260 = vmatpush1.msra.mxu0 0.0
        %261 = vmatprep.subr.mxu0 0.0
        %262 = vmatpush1.msra.mxu0 %v225
        %263 = vmatprep.subr.mxu0 0.0
        %264 = vmatpush1.msra.mxu0 %v224
        %265 = vmatprep.subr.mxu0 0.0
        %266 = vmatpush2.msra.mxu0 0.0
        %267 = vmatprep.subr.mxu0 0.0
        %268 = vmatpush2.msra.mxu0 0.0
        %269 = vmatprep.subr.mxu0 0.0
        %270 = vmatpush2.msra.mxu0 0.0
        %271 = vmatprep.subr.mxu0 0.0
        %272 = vmatpush2.msra.mxu0 0.0
        %273 = vmatprep.subr.mxu0 0.0
        %274 = vmatpush2.msra.mxu0 0.0
        %275 = vmatprep.subr.mxu0 0.0
        %276 = vmatpush2.msra.mxu0 0.0
        %277 = vmatprep.subr.mxu0 0.0
        %278 = vmatpush2.msra.mxu0 0.0
        %279 = vmatprep.subr.mxu0 0.0
        %280 = vmatpush2.msra.mxu0 0.0
        %281 = vmatprep.subr.mxu0 0.0
        %282 = vmatpush2.msra.mxu0 0.0
        %283 = vmatprep.subr.mxu0 0.0
        %284 = vmatpush2.msra.mxu0 0.0
        %285 = vmatprep.subr.mxu0 0.0
        %286 = vmatpush2.msra.mxu0 0.0
        %287 = vmatprep.subr.mxu0 0.0
        %288 = vmatpush2.msra.mxu0 0.0
        %289 = vmatprep.subr.mxu0 0.0
        %290 = vmatpush2.msra.mxu0 0.0
        %291 = vmatprep.subr.mxu0 0.0
        %292 = vmatpush2.msra.mxu0 0.0
        %293 = vmatprep.subr.mxu0 0.0
        %294 = vmatpush2.msra.mxu0 0.0
        %295 = vmatprep.subr.mxu0 0.0
        %296 = vmatpush2.msra.mxu0 0.0
        %297 = vmatprep.mubr.f32.mxu0 0.0
        %298 = vmatmul.mubr.f32.gmra.mxu0 %v228
        %v299 = vpop.f32.mrf.mxu0
        %v300 = vadd.f32 0.0, %v299
        %v301 = vpop.f32.mrf.mxu0
        %302 = vmatprep.mubr.f32.mxu0 0.0
        %303 = vmatmul.mubr.f32.gmra.mxu0 %v231
        %v304 = vpop.f32.mrf.mxu0
        %v305 = vadd.f32 0.0, %v304
        %v306 = vpop.f32.mrf.mxu0
        %307 = vdwg.mxu0
        %p308 = scmp.eq.s32.totalorder %s27, 0
        // Predicated region
        $region37: #{tpu_custom_call.1} parent=27 // pred_check
          %p309 = pneg %p308
        $region38: #{tpu_custom_call.1} parent=27 // pred_check_branch
          %311 = sbr.rel (%p309) target = $region40
        $region39: #{tpu_custom_call.1} parent=27 // pred_region
          %312 = vst [vmem:[%s220] sm:$0xff] %v300
          %313 = vst [vmem:[%s220 + $0x8] sm:$0xff] %v305
        $region40: #{tpu_custom_call.1} parent=27 // pred_fallthru
          _
        %p314 = scmp.gt.s32.totalorder %s27, 0
        // Predicated region
        $region41: #{tpu_custom_call.1} parent=27 // pred_check
          %p315 = pneg %p314
        $region42: #{tpu_custom_call.1} parent=27 // pred_check_branch
          %317 = sbr.rel (%p315) target = $region44
        $region43: #{tpu_custom_call.1} parent=27 // pred_region
          %v318 = vld [vmem:[%s220] sm:$0xff]
          %v319 = vld [vmem:[%s220 + $0x8] sm:$0xff]
          %v320 = vadd.f32 %v318, %v300
          %v321 = vadd.f32 %v319, %v305
          %322 = vst [vmem:[%s220] sm:$0xff] %v320
          %323 = vst [vmem:[%s220 + $0x8] sm:$0xff] %v321
        $region44: #{tpu_custom_call.1} parent=27 // pred_fallthru
          _
        // Predicated region
        $region45: #{tpu_custom_call.1} parent=27 // pred_check
          %p324 = pneg %p308
        $region46: #{tpu_custom_call.1} parent=27 // pred_check_branch
          %326 = sbr.rel (%p324) target = $region48
        $region47: #{tpu_custom_call.1} parent=27 // pred_region
          %v327 = vld [vmem:[%s220] sm:$0xff]
          %v328 = vld [vmem:[%s220 + $0x8] sm:$0xff]
          %v329 = vmax.f32 %v327, 0.0
          %v330 = vmax.f32 %v328, 0.0
          %v331 = vadd.f32 %v329, %v330
          %v332 = vrot.slane %v331, 4
          %v333 = vadd.f32 %v331, %v332
          %v334 = vrot.slane %v333, 2
          %v335 = vadd.f32 %v333, %v334
          %v336 = vrot.slane %v335, 1
          %v337 = vadd.f32 %v335, %v336
          %v338 = vrcp.pop 16.0
          %v339 = vmul.f32 %v337, %v338
          %v340 = vadd.f32 %v339, 1e-06
          %v341 = vrcp.pop %v340
          %v342 = vmul.f32 %v329, %v341
          %v343 = vmul.f32 %v330, %v341
          %v344 = vmax.f32 %v342, 0.0
          %v345 = vmax.f32 %v343, 0.0
          %vm346 = vcmp.ne.f32.partialorder %v342, %v342
          %vm347 = vcmp.ne.f32.partialorder %v343, %v343
          %v348 = vadd.f32 %v342, 0.0
          %v349 = vadd.f32 %v343, 0.0
          %v350 = vand.u32 2147483647, %v342
          %v351 = vand.u32 2147483647, %v343
          %v352 = vsub.f32 0.0, %v350
          %v353 = vsub.f32 0.0, %v351
          %v354 = vmul.f32 %v352, 1.442695
          %v355 = vpow.pop %v354
          %v356 = vmul.f32 %v353, 1.442695
          %v357 = vpow.pop %v356
          %v358 = vadd.f32 %v355, 1.0
          %v359 = vlog2.pop %v358
          %v360 = vmul.f32 %v359, 0.6931472
          %v361 = vmul.f32 -0.5, %v355
          %v362 = vadd.f32 %v361, 1.0
          %v363 = vmul.f32 %v362, %v355
          %v364 = vand.u32 2147483647, %v355
          %vm365 = vcmp.lt.f32.partialorder %v364, 0.0004427343
          %v366 = vsel %vm365, %v363, %v360
          %v367 = vadd.f32 %v357, 1.0
          %v368 = vlog2.pop %v367
          %v369 = vmul.f32 %v368, 0.6931472
          %v370 = vmul.f32 -0.5, %v357
          %v371 = vadd.f32 %v370, 1.0
          %v372 = vmul.f32 %v371, %v357
          %v373 = vand.u32 2147483647, %v357
          %vm374 = vcmp.lt.f32.partialorder %v373, 0.0004427343
          %v375 = vsel %vm374, %v372, %v369
          %v376 = vadd.f32 %v344, %v366
          %v377 = vadd.f32 %v345, %v375
          %v378 = vsel %vm346, %v348, %v376
          %v379 = vsel %vm347, %v349, %v377
          %380 = vst [vmem:[%s220] sm:$0xff] %v378
          %381 = vst [vmem:[%s220 + $0x8] sm:$0xff] %v379
        $region48: #{tpu_custom_call.1} parent=27 // pred_fallthru
          _
        %s382 = sand.u32 %s98, 1
        %s383 = scalar_lea.sflag [#allocation4], %s382
        %s384 = sand.u32 %s98, 1
        %s385 = smul.addr %s384, 16
        %s386 = scalar_lea.vmem [#allocation7], %s385
        // Predicated region
        $region49: #{tpu_custom_call.1} parent=27 // pred_check
          %p387 = pneg %p108
        $region50: #{tpu_custom_call.1} parent=27 // pred_check_branch
          %389 = sbr.rel (%p387) target = $region52
        $region51: #{tpu_custom_call.1} parent=27 // pred_region
          %s391 = ssub.s32 256, 256
          %392 = vsyncadd %s383, %s391
          %s393 = smul.addr %s26, 2
          %s394 = smul.addr %s393, 128
          %s395 = scalar_lea.hbm %s2, %s394
          %s396 = sshll.u32 %s386, 4
          %s397 = int_to_ptr.vmem [resolvable:$true] %s396
          %402 = dma.vmem_to_hbm [thread:$0]  %s397, 256, %s395, %s383, 128, 128, 8
        $region52: #{tpu_custom_call.1} parent=27 // pred_fallthru
          _
      $region28: #{tpu_custom_call.1} parent=5 // pred_fallthru
        _
      %p403 = scmp.le.s32.totalorder 2, %s17
      // Predicated region
      $region53: #{tpu_custom_call.1} parent=5 // pred_check
        %p404 = pneg %p403
      $region54: #{tpu_custom_call.1} parent=5 // pred_check_branch
        %406 = sbr.rel (%p404) target = $region56
      $region55: #{tpu_custom_call.1} parent=5 // pred_region
        %s407 = ssub.s32 %s17, 2
        // Predicated region
        $region57: #{tpu_custom_call.1} parent=55 // pred_check
          %p408 = pneg %p114
        $region58: #{tpu_custom_call.1} parent=55 // pred_check_branch
          %410 = sbr.rel (%p408) target = $region60
        $region59: #{tpu_custom_call.1} parent=55 // pred_region
          %s411 = sand.u32 %s99, 1
          %s412 = scalar_lea.sflag [#allocation4], %s411
          %s413 = sand.u32 %s99, 1
          %s414 = smul.addr %s413, 16
          %s415 = scalar_lea.vmem [#allocation7], %s414
          %416 = dma.done %s412, 256
        $region60: #{tpu_custom_call.1} parent=55 // pred_fallthru
          _
      $region56: #{tpu_custom_call.1} parent=5 // pred_fallthru
        _
    $region6: #{tpu_custom_call.1} parent=1 // loop_footer
      %s21 = sadd.s32 1, %s17
    $region7: #{tpu_custom_call.1} parent=1 // loop_footer_branch
      %16 = sbr.rel target = $region3
    $region8: #{tpu_custom_call.1} parent=1 // loop_exit
      _
    %417 = vsyncpa [#allocation3], 1
    %s418 = scalar_lea.sflag [#allocation3], 1
    %419 = vsyncpa %s418, 1
    %420 = vsyncpa [#allocation6], 1
    %s421 = scalar_lea.sflag [#allocation6], 1
    %422 = vsyncpa %s421, 1
    %423 = vsyncpa [#allocation4], 1
    %s424 = scalar_lea.sflag [#allocation4], 1
    %425 = vsyncpa %s424, 1

</llo_original>
